<compile_context>
chip_gen: v7x
topology: tpu7x:2x2x1
jax: 0.10.0
libtpu: 0.0.40
codegen_flags: <defaults>
</compile_context>

<pallas_src>
import jax
import jax.numpy as jnp
from jax.experimental import pallas as pl
from jax.experimental.pallas import tpu as pltpu

LN_EPS = 1e-5                       # nn.LayerNorm default
TILE_B_CAP = 512                    # rows per grid step (8-aligned; 512-1024 ~ 85% HBM roofline)
_WEIGHT_SINGLE_BUFFER_BYTES = 1 << 20   # single-buffer resident weights only once they matter


# --------------------------------------------------------------------------
# Fused kernel: LayerNorm(stats only) -> bf16 x @ W' (+ b', f32) -> ReLU, x L.
# --------------------------------------------------------------------------
def _make_ffnet_kernel(num_layers):
    def kernel(x_ref, *refs):
        # refs = (w0, b0, w1, b1, ..., w_{L-1}, b_{L-1}, o_ref)
        o_ref = refs[-1]
        h = x_ref[...].astype(jnp.float32)
        outs = []
        for i in range(num_layers):            # static unroll, traced once
            w_ref = refs[2 * i]
            b_ref = refs[2 * i + 1]
            # LayerNorm statistics (biased variance, eps inside rsqrt) in f32.
            mean = jnp.mean(h, axis=-1, keepdims=True)
            centered = h - mean
            var = jnp.mean(centered * centered, axis=-1, keepdims=True)
            hn = centered * jax.lax.rsqrt(var + LN_EPS)
            # Affine is pre-folded into W'/b'.  MXU operands in bf16 (w_ref is
            # stored bf16), accumulation and everything elementwise in f32.
            y = jnp.dot(hn.astype(w_ref.dtype), w_ref[...],
                        preferred_element_type=jnp.float32)
            h = jnp.maximum(y + b_ref[...], 0.0)
            outs.append(h)
        # Single lane-dense (4*32 = 128 lanes) store of all per-layer activations.
        o_ref[...] = jnp.concatenate(outs, axis=-1).astype(o_ref.dtype)

    return kernel


def _choose_tile_b(batch, tile_cap=TILE_B_CAP):
    """8-aligned batch tile, as large as possible up to `tile_cap`, but capped
    at ~batch/2 so the parallel grid has >= 2 steps whenever the batch allows
    it (v7x megacore).  Tiny batches fall back to an 8-row tile."""
    half = max(8, (batch // 2) // 8 * 8)
    return min(tile_cap, half)


# --------------------------------------------------------------------------
# Wrapper: one pallas_call for the whole net; returns [y1, ..., yL].
# --------------------------------------------------------------------------
def ffnet_forward(x, folded_params):
    """folded_params: sequence of (W', b') with W' = (gamma[:,None]*W).astype(bf16),
    b' = beta@W + b (f32)."""
    B, c_in0 = x.shape
    num_layers = len(folded_params)
    c_ins = [w.shape[0] for w, _ in folded_params]
    c_outs = [w.shape[1] for w, _ in folded_params]
    total_out = sum(c_outs)

    # Fixed-size tiling + cdiv grid (pad the batch, slice it back afterwards).
    tile_b = _choose_tile_b(B)
    grid_b = -(-B // tile_b)            # cdiv
    padded_b = grid_b * tile_b
    if padded_b != B:
        x = jnp.pad(x, ((0, padded_b - B), (0, 0)))   # zero rows: LN stays finite
    grid = (grid_b,)

    in_specs = [pl.BlockSpec((tile_b, c_in0), lambda i: (i, 0))]
    flat_args = [x]
    for (w, b), cin, cout in zip(folded_params, c_ins, c_outs):
        w_kwargs = {}
        if w.size * w.dtype.itemsize >= _WEIGHT_SINGLE_BUFFER_BYTES:
            # Resident weight (constant index_map): a second pipeline buffer is
            # pure VMEM waste; only bother overriding once the copy is big.
            w_kwargs["pipeline_mode"] = pl.Buffered(1)
        in_specs.append(pl.BlockSpec((cin, cout), lambda i: (0, 0), **w_kwargs))
        in_specs.append(pl.BlockSpec((1, cout), lambda i: (0, 0)))
        flat_args.append(w)
        flat_args.append(b)

    # Advisory cost estimate for the XLA scheduler (padded work, ints).
    flops = int(sum(2 * padded_b * ci * co + 8 * padded_b * ci
                    for ci, co in zip(c_ins, c_outs)))
    transcendentals = int(padded_b * num_layers)          # one rsqrt per row per layer
    bytes_accessed = int(
        x.size * x.dtype.itemsize
        + sum(w.size * w.dtype.itemsize + b.size * b.dtype.itemsize
              for w, b in folded_params)
        + padded_b * total_out * 4)

    # Scoped-VMEM override only when the working set would exceed the smallest
    # default (16 MiB on v5e); capped at v7x's 64 MiB physical ceiling.
    bytes_w = sum(w.size * w.dtype.itemsize + b.size * b.dtype.itemsize
                  for w, b in folded_params)
    vmem_est = (2 * tile_b * c_in0 * 4            # double-buffered input tile
                + 2 * tile_b * total_out * 4      # double-buffered output slab
                + 2 * bytes_w                     # (double-)buffered weights/biases
                + 4 * tile_b * total_out * 4)     # headroom for in-kernel temporaries
    compiler_kwargs = {}
    if vmem_est > (16 << 20):
        compiler_kwargs["vmem_limit_bytes"] = int(min(vmem_est + (4 << 20), 64 << 20))

    slab = pl.pallas_call(
        _make_ffnet_kernel(num_layers),
        out_shape=jax.ShapeDtypeStruct((padded_b, total_out), jnp.float32),
        grid=grid,
        in_specs=in_specs,
        out_specs=pl.BlockSpec((tile_b, total_out), lambda i: (i, 0)),
        compiler_params=pltpu.CompilerParams(
            dimension_semantics=("parallel",),
            **compiler_kwargs,
        ),
        cost_estimate=pl.CostEstimate(
            flops=flops,
            transcendentals=transcendentals,
            bytes_accessed=bytes_accessed,
        ),
    )(*flat_args)

    # Drop padding rows; slice the lane-dense slab back into per-layer outputs.
    slab = slab[:B]
    outs = []
    off = 0
    for co in c_outs:
        outs.append(slab[:, off:off + co])
        off += co
    return outs


# --------------------------------------------------------------------------
# Parameters: PyTorch-style init + LayerNorm-affine folding.
# --------------------------------------------------------------------------
def init_ffnet_params(key, x_shape=(4, 4), c_outs=(32, 32, 32, 32)):
    c_in0 = x_shape[0] * x_shape[1]
    c_ins = [c_in0] + list(c_outs[:-1])
    params = []
    for cin, cout in zip(c_ins, c_outs):
        key, kw, kb, kg, kbt = jax.random.split(key, 5)
        bound = 1.0 / (cin ** 0.5)
        w = jax.random.uniform(kw, (cin, cout), jnp.float32, -bound, bound)  # [Cin, Cout]
        b = jax.random.uniform(kb, (cout,), jnp.float32, -bound, bound)
        # Non-trivial gamma/beta so the affine-folding path is actually exercised.
        gamma = 1.0 + 0.1 * jax.random.normal(kg, (cin,), jnp.float32)
        beta = 0.1 * jax.random.normal(kbt, (cin,), jnp.float32)
        params.append({"gamma": gamma, "beta": beta, "w": w, "b": b})
    return params


def fold_layernorm_into_linear(params, matmul_dtype=jnp.bfloat16):
    """W' = diag(gamma) @ W (folded in f32, stored in bf16 for the MXU),
    b' = beta @ W + b (kept f32, added after the f32-accumulated matmul)."""
    folded = []
    for p in params:
        w = (p["gamma"][:, None] * p["w"]).astype(matmul_dtype)
        b = (p["beta"] @ p["w"] + p["b"]).astype(jnp.float32).reshape(1, -1)
        folded.append((w, b))
    return tuple(folded)


# --------------------------------------------------------------------------
# Pure-JAX f32 reference (unfolded, matches torch.nn.LayerNorm/Linear/ReLU).
# --------------------------------------------------------------------------
def _reference_forward(x, params):
    outs = []
    h = x
    for p in params:
        mean = jnp.mean(h, axis=-1, keepdims=True)
        var = jnp.mean((h - mean) ** 2, axis=-1, keepdims=True)
        hn = (h - mean) / jnp.sqrt(var + LN_EPS)
        hn = hn * p["gamma"] + p["beta"]
        h = jnp.maximum(hn @ p["w"] + p["b"], 0.0)
        outs.append(h)
    return outs


if __name__ == "__main__":
    key = jax.random.PRNGKey(0)
    k_params, k_x = jax.random.split(key)

    # Small shapes consistent with the module: xShape=[4,4] -> cIn=16,
    # 4 layers of 32 -> concatenated output slab is 128 lanes wide.
    # batch=12 deliberately exercises the cdiv grid (2 steps of 8 rows, padded).
    x_shape = (4, 4)
    c_outs = (32, 32, 32, 32)
    batch = 12

    params = init_ffnet_params(k_params, x_shape=x_shape, c_outs=c_outs)
    folded = fold_layernorm_into_linear(params)
    x = jax.random.normal(k_x, (batch, x_shape[0] * x_shape[1]), jnp.float32)

    outs = jax.jit(ffnet_forward)(x, folded)
    outs = jax.block_until_ready(outs)

    # Correctness check against the unfolded pure-f32 reference.  Tolerance is
    # loosened (vs the all-f32 version) to cover bf16 MXU operands.
    refs = _reference_forward(x, params)
    for o, r in zip(outs, refs):
        assert o.shape == r.shape, (o.shape, r.shape)
        err = float(jnp.max(jnp.abs(o - r)))
        assert err < 5e-2, f"max abs err {err}"

    print("KERNEL_OK")
</pallas_src>

<mosaic_0001>
module attributes {stable_mosaic.version = 11 : i64} {
  func.func @kernel(%arg0: i32, %arg1: memref<8x16xf32, #tpu.memory_space<vmem>>, %arg2: memref<16x32xbf16, #tpu.memory_space<vmem>>, %arg3: memref<1x32xf32, #tpu.memory_space<vmem>>, %arg4: memref<32x32xbf16, #tpu.memory_space<vmem>>, %arg5: memref<1x32xf32, #tpu.memory_space<vmem>>, %arg6: memref<32x32xbf16, #tpu.memory_space<vmem>>, %arg7: memref<1x32xf32, #tpu.memory_space<vmem>>, %arg8: memref<32x32xbf16, #tpu.memory_space<vmem>>, %arg9: memref<1x32xf32, #tpu.memory_space<vmem>>, %arg10: memref<8x128xf32, #tpu.memory_space<vmem>>) attributes {dimension_semantics = [#tpu.dimension_semantics<parallel>], iteration_bounds = array<i64: 2>, scalar_prefetch = 0 : i64, scratch_operands = 0 : i64, tpu.core_type = #tpu.core_type<tc>, window_params = [{transform_indices = @transform_0, window_bounds = array<i64: 8, 16>}, {pipeline_mode = #tpu.pipeline_mode<synchronous>, transform_indices = @transform_1, window_bounds = array<i64: 16, 32>}, {pipeline_mode = #tpu.pipeline_mode<synchronous>, transform_indices = @transform_2, window_bounds = array<i64: 1, 32>}, {pipeline_mode = #tpu.pipeline_mode<synchronous>, transform_indices = @transform_3, window_bounds = array<i64: 32, 32>}, {pipeline_mode = #tpu.pipeline_mode<synchronous>, transform_indices = @transform_4, window_bounds = array<i64: 1, 32>}, {pipeline_mode = #tpu.pipeline_mode<synchronous>, transform_indices = @transform_5, window_bounds = array<i64: 32, 32>}, {pipeline_mode = #tpu.pipeline_mode<synchronous>, transform_indices = @transform_6, window_bounds = array<i64: 1, 32>}, {pipeline_mode = #tpu.pipeline_mode<synchronous>, transform_indices = @transform_7, window_bounds = array<i64: 32, 32>}, {pipeline_mode = #tpu.pipeline_mode<synchronous>, transform_indices = @transform_8, window_bounds = array<i64: 1, 32>}, {transform_indices = @transform_9, window_bounds = array<i64: 8, 128>}]} {
    %c0 = arith.constant 0 : index
    %c0_0 = arith.constant 0 : index
    %0 = vector.load %arg1[%c0, %c0_0] : memref<8x16xf32, #tpu.memory_space<vmem>>, vector<8x16xf32>
    %cst = arith.constant dense<0.000000e+00> : vector<8xf32>
    %1 = vector.multi_reduction <add>, %0, %cst [1] : vector<8x16xf32> to vector<8xf32>
    %2 = vector.shape_cast %1 : vector<8xf32> to vector<8x1xf32>
    %cst_1 = arith.constant 1.600000e+01 : f32
    %3 = vector.broadcast %cst_1 : f32 to vector<8x1xf32>
    %4 = arith.divf %2, %3 : vector<8x1xf32>
    %5 = vector.broadcast %4 : vector<8x1xf32> to vector<8x16xf32>
    %6 = arith.subf %0, %5 : vector<8x16xf32>
    %7 = arith.mulf %6, %6 : vector<8x16xf32>
    %cst_2 = arith.constant dense<0.000000e+00> : vector<8xf32>
    %8 = vector.multi_reduction <add>, %7, %cst_2 [1] : vector<8x16xf32> to vector<8xf32>
    %9 = vector.shape_cast %8 : vector<8xf32> to vector<8x1xf32>
    %cst_3 = arith.constant 1.600000e+01 : f32
    %10 = vector.broadcast %cst_3 : f32 to vector<8x1xf32>
    %11 = arith.divf %9, %10 : vector<8x1xf32>
    %cst_4 = arith.constant 9.99999974E-6 : f32
    %12 = vector.broadcast %cst_4 : f32 to vector<8x1xf32>
    %13 = arith.addf %11, %12 : vector<8x1xf32>
    %14 = math.rsqrt %13 : vector<8x1xf32>
    %15 = vector.broadcast %14 : vector<8x1xf32> to vector<8x16xf32>
    %16 = arith.mulf %6, %15 : vector<8x16xf32>
    %17 = arith.truncf %16 : vector<8x16xf32> to vector<8x16xbf16>
    %c0_5 = arith.constant 0 : index
    %c0_6 = arith.constant 0 : index
    %18 = vector.load %arg2[%c0_5, %c0_6] : memref<16x32xbf16, #tpu.memory_space<vmem>>, vector<16x32xbf16>
    %cst_7 = arith.constant dense<0.000000e+00> : vector<8x32xf32>
    %19 = tpu.matmul %17, %18, %cst_7 {dimension_numbers = #tpu.dot_dimension_numbers<[1], [0], [0], [1], [0, 0, 1, 1], [], []>} : vector<8x16xbf16>, vector<16x32xbf16>, vector<8x32xf32> -> vector<8x32xf32>
    %c0_8 = arith.constant 0 : index
    %c0_9 = arith.constant 0 : index
    %20 = vector.load %arg3[%c0_8, %c0_9] : memref<1x32xf32, #tpu.memory_space<vmem>>, vector<1x32xf32>
    %21 = vector.broadcast %20 : vector<1x32xf32> to vector<8x32xf32>
    %22 = arith.addf %19, %21 : vector<8x32xf32>
    %cst_10 = arith.constant 0.000000e+00 : f32
    %23 = vector.broadcast %cst_10 : f32 to vector<8x32xf32>
    %24 = arith.maximumf %22, %23 : vector<8x32xf32>
    %cst_11 = arith.constant dense<0.000000e+00> : vector<8xf32>
    %25 = vector.multi_reduction <add>, %24, %cst_11 [1] : vector<8x32xf32> to vector<8xf32>
    %26 = vector.shape_cast %25 : vector<8xf32> to vector<8x1xf32>
    %cst_12 = arith.constant 3.200000e+01 : f32
    %27 = vector.broadcast %cst_12 : f32 to vector<8x1xf32>
    %28 = arith.divf %26, %27 : vector<8x1xf32>
    %29 = vector.broadcast %28 : vector<8x1xf32> to vector<8x32xf32>
    %30 = arith.subf %24, %29 : vector<8x32xf32>
    %31 = arith.mulf %30, %30 : vector<8x32xf32>
    %cst_13 = arith.constant dense<0.000000e+00> : vector<8xf32>
    %32 = vector.multi_reduction <add>, %31, %cst_13 [1] : vector<8x32xf32> to vector<8xf32>
    %33 = vector.shape_cast %32 : vector<8xf32> to vector<8x1xf32>
    %cst_14 = arith.constant 3.200000e+01 : f32
    %34 = vector.broadcast %cst_14 : f32 to vector<8x1xf32>
    %35 = arith.divf %33, %34 : vector<8x1xf32>
    %cst_15 = arith.constant 9.99999974E-6 : f32
    %36 = vector.broadcast %cst_15 : f32 to vector<8x1xf32>
    %37 = arith.addf %35, %36 : vector<8x1xf32>
    %38 = math.rsqrt %37 : vector<8x1xf32>
    %39 = vector.broadcast %38 : vector<8x1xf32> to vector<8x32xf32>
    %40 = arith.mulf %30, %39 : vector<8x32xf32>
    %41 = arith.truncf %40 : vector<8x32xf32> to vector<8x32xbf16>
    %c0_16 = arith.constant 0 : index
    %c0_17 = arith.constant 0 : index
    %42 = vector.load %arg4[%c0_16, %c0_17] : memref<32x32xbf16, #tpu.memory_space<vmem>>, vector<32x32xbf16>
    %cst_18 = arith.constant dense<0.000000e+00> : vector<8x32xf32>
    %43 = tpu.matmul %41, %42, %cst_18 {dimension_numbers = #tpu.dot_dimension_numbers<[1], [0], [0], [1], [0, 0, 1, 1], [], []>} : vector<8x32xbf16>, vector<32x32xbf16>, vector<8x32xf32> -> vector<8x32xf32>
    %c0_19 = arith.constant 0 : index
    %c0_20 = arith.constant 0 : index
    %44 = vector.load %arg5[%c0_19, %c0_20] : memref<1x32xf32, #tpu.memory_space<vmem>>, vector<1x32xf32>
    %45 = vector.broadcast %44 : vector<1x32xf32> to vector<8x32xf32>
    %46 = arith.addf %43, %45 : vector<8x32xf32>
    %cst_21 = arith.constant 0.000000e+00 : f32
    %47 = vector.broadcast %cst_21 : f32 to vector<8x32xf32>
    %48 = arith.maximumf %46, %47 : vector<8x32xf32>
    %cst_22 = arith.constant dense<0.000000e+00> : vector<8xf32>
    %49 = vector.multi_reduction <add>, %48, %cst_22 [1] : vector<8x32xf32> to vector<8xf32>
    %50 = vector.shape_cast %49 : vector<8xf32> to vector<8x1xf32>
    %cst_23 = arith.constant 3.200000e+01 : f32
    %51 = vector.broadcast %cst_23 : f32 to vector<8x1xf32>
    %52 = arith.divf %50, %51 : vector<8x1xf32>
    %53 = vector.broadcast %52 : vector<8x1xf32> to vector<8x32xf32>
    %54 = arith.subf %48, %53 : vector<8x32xf32>
    %55 = arith.mulf %54, %54 : vector<8x32xf32>
    %cst_24 = arith.constant dense<0.000000e+00> : vector<8xf32>
    %56 = vector.multi_reduction <add>, %55, %cst_24 [1] : vector<8x32xf32> to vector<8xf32>
    %57 = vector.shape_cast %56 : vector<8xf32> to vector<8x1xf32>
    %cst_25 = arith.constant 3.200000e+01 : f32
    %58 = vector.broadcast %cst_25 : f32 to vector<8x1xf32>
    %59 = arith.divf %57, %58 : vector<8x1xf32>
    %cst_26 = arith.constant 9.99999974E-6 : f32
    %60 = vector.broadcast %cst_26 : f32 to vector<8x1xf32>
    %61 = arith.addf %59, %60 : vector<8x1xf32>
    %62 = math.rsqrt %61 : vector<8x1xf32>
    %63 = vector.broadcast %62 : vector<8x1xf32> to vector<8x32xf32>
    %64 = arith.mulf %54, %63 : vector<8x32xf32>
    %65 = arith.truncf %64 : vector<8x32xf32> to vector<8x32xbf16>
    %c0_27 = arith.constant 0 : index
    %c0_28 = arith.constant 0 : index
    %66 = vector.load %arg6[%c0_27, %c0_28] : memref<32x32xbf16, #tpu.memory_space<vmem>>, vector<32x32xbf16>
    %cst_29 = arith.constant dense<0.000000e+00> : vector<8x32xf32>
    %67 = tpu.matmul %65, %66, %cst_29 {dimension_numbers = #tpu.dot_dimension_numbers<[1], [0], [0], [1], [0, 0, 1, 1], [], []>} : vector<8x32xbf16>, vector<32x32xbf16>, vector<8x32xf32> -> vector<8x32xf32>
    %c0_30 = arith.constant 0 : index
    %c0_31 = arith.constant 0 : index
    %68 = vector.load %arg7[%c0_30, %c0_31] : memref<1x32xf32, #tpu.memory_space<vmem>>, vector<1x32xf32>
    %69 = vector.broadcast %68 : vector<1x32xf32> to vector<8x32xf32>
    %70 = arith.addf %67, %69 : vector<8x32xf32>
    %cst_32 = arith.constant 0.000000e+00 : f32
    %71 = vector.broadcast %cst_32 : f32 to vector<8x32xf32>
    %72 = arith.maximumf %70, %71 : vector<8x32xf32>
    %cst_33 = arith.constant dense<0.000000e+00> : vector<8xf32>
    %73 = vector.multi_reduction <add>, %72, %cst_33 [1] : vector<8x32xf32> to vector<8xf32>
    %74 = vector.shape_cast %73 : vector<8xf32> to vector<8x1xf32>
    %cst_34 = arith.constant 3.200000e+01 : f32
    %75 = vector.broadcast %cst_34 : f32 to vector<8x1xf32>
    %76 = arith.divf %74, %75 : vector<8x1xf32>
    %77 = vector.broadcast %76 : vector<8x1xf32> to vector<8x32xf32>
    %78 = arith.subf %72, %77 : vector<8x32xf32>
    %79 = arith.mulf %78, %78 : vector<8x32xf32>
    %cst_35 = arith.constant dense<0.000000e+00> : vector<8xf32>
    %80 = vector.multi_reduction <add>, %79, %cst_35 [1] : vector<8x32xf32> to vector<8xf32>
    %81 = vector.shape_cast %80 : vector<8xf32> to vector<8x1xf32>
    %cst_36 = arith.constant 3.200000e+01 : f32
    %82 = vector.broadcast %cst_36 : f32 to vector<8x1xf32>
    %83 = arith.divf %81, %82 : vector<8x1xf32>
    %cst_37 = arith.constant 9.99999974E-6 : f32
    %84 = vector.broadcast %cst_37 : f32 to vector<8x1xf32>
    %85 = arith.addf %83, %84 : vector<8x1xf32>
    %86 = math.rsqrt %85 : vector<8x1xf32>
    %87 = vector.broadcast %86 : vector<8x1xf32> to vector<8x32xf32>
    %88 = arith.mulf %78, %87 : vector<8x32xf32>
    %89 = arith.truncf %88 : vector<8x32xf32> to vector<8x32xbf16>
    %c0_38 = arith.constant 0 : index
    %c0_39 = arith.constant 0 : index
    %90 = vector.load %arg8[%c0_38, %c0_39] : memref<32x32xbf16, #tpu.memory_space<vmem>>, vector<32x32xbf16>
    %cst_40 = arith.constant dense<0.000000e+00> : vector<8x32xf32>
    %91 = tpu.matmul %89, %90, %cst_40 {dimension_numbers = #tpu.dot_dimension_numbers<[1], [0], [0], [1], [0, 0, 1, 1], [], []>} : vector<8x32xbf16>, vector<32x32xbf16>, vector<8x32xf32> -> vector<8x32xf32>
    %c0_41 = arith.constant 0 : index
    %c0_42 = arith.constant 0 : index
    %92 = vector.load %arg9[%c0_41, %c0_42] : memref<1x32xf32, #tpu.memory_space<vmem>>, vector<1x32xf32>
    %93 = vector.broadcast %92 : vector<1x32xf32> to vector<8x32xf32>
    %94 = arith.addf %91, %93 : vector<8x32xf32>
    %cst_43 = arith.constant 0.000000e+00 : f32
    %95 = vector.broadcast %cst_43 : f32 to vector<8x32xf32>
    %96 = arith.maximumf %94, %95 : vector<8x32xf32>
    %97 = tpu.concatenate %24, %48, %72, %96 in 1 : vector<8x32xf32>, vector<8x32xf32>, vector<8x32xf32>, vector<8x32xf32> -> vector<8x128xf32>
    %c0_44 = arith.constant 0 : index
    %c0_45 = arith.constant 0 : index
    %98 = vector.load %arg10[%c0_44, %c0_45] : memref<8x128xf32, #tpu.memory_space<vmem>>, vector<8x128xf32>
    tpu.vector_store %arg10[%c0_44, %c0_45], %97 {strides = array<i32>} : memref<8x128xf32, #tpu.memory_space<vmem>>, vector<8x128xf32>,
    return
  }
  func.func @transform_0(%arg0: i32) -> (i32, i32) {
    %c0_i32 = arith.constant 0 : i32
    %c0_i32_0 = arith.constant 0 : i32
    return %arg0, %c0_i32 : i32, i32
  }
  func.func @transform_1(%arg0: i32) -> (i32, i32) {
    %c0_i32 = arith.constant 0 : i32
    %c0_i32_0 = arith.constant 0 : i32
    %c0_i32_1 = arith.constant 0 : i32
    return %c0_i32, %c0_i32_0 : i32, i32
  }
  func.func @transform_2(%arg0: i32) -> (i32, i32) {
    %c0_i32 = arith.constant 0 : i32
    %c0_i32_0 = arith.constant 0 : i32
    %c0_i32_1 = arith.constant 0 : i32
    return %c0_i32, %c0_i32_0 : i32, i32
  }
  func.func @transform_3(%arg0: i32) -> (i32, i32) {
    %c0_i32 = arith.constant 0 : i32
    %c0_i32_0 = arith.constant 0 : i32
    %c0_i32_1 = arith.constant 0 : i32
    return %c0_i32, %c0_i32_0 : i32, i32
  }
  func.func @transform_4(%arg0: i32) -> (i32, i32) {
    %c0_i32 = arith.constant 0 : i32
    %c0_i32_0 = arith.constant 0 : i32
    %c0_i32_1 = arith.constant 0 : i32
    return %c0_i32, %c0_i32_0 : i32, i32
  }
  func.func @transform_5(%arg0: i32) -> (i32, i32) {
    %c0_i32 = arith.constant 0 : i32
    %c0_i32_0 = arith.constant 0 : i32
    %c0_i32_1 = arith.constant 0 : i32
    return %c0_i32, %c0_i32_0 : i32, i32
  }
  func.func @transform_6(%arg0: i32) -> (i32, i32) {
    %c0_i32 = arith.constant 0 : i32
    %c0_i32_0 = arith.constant 0 : i32
    %c0_i32_1 = arith.constant 0 : i32
    return %c0_i32, %c0_i32_0 : i32, i32
  }
  func.func @transform_7(%arg0: i32) -> (i32, i32) {
    %c0_i32 = arith.constant 0 : i32
    %c0_i32_0 = arith.constant 0 : i32
    %c0_i32_1 = arith.constant 0 : i32
    return %c0_i32, %c0_i32_0 : i32, i32
  }
  func.func @transform_8(%arg0: i32) -> (i32, i32) {
    %c0_i32 = arith.constant 0 : i32
    %c0_i32_0 = arith.constant 0 : i32
    %c0_i32_1 = arith.constant 0 : i32
    return %c0_i32, %c0_i32_0 : i32, i32
  }
  func.func @transform_9(%arg0: i32) -> (i32, i32) {
    %c0_i32 = arith.constant 0 : i32
    %c0_i32_0 = arith.constant 0 : i32
    return %arg0, %c0_i32 : i32, i32
  }
}

</mosaic_0001>

<llo_original>
// kernel: ffnet_forward.1
$region0: #{ffnet_forward.1}
  #allocation0 [shape = 'u32[]', space=smem, size = 0x4, offset = 0x4, fixed_abs, tag = 'smem constant byte address 0x4 - core index']
  #allocation1 [shape = 'u32[144,128]{1,0:T(1,128)}', space=vmem, size = 0x12000, scoped, tag = 'internal scratch']
  %s0 = inlined_call_operand.vmem [shape: f32[16,16], index: 0, kind: input, shape index: {}]
  %s1 = inlined_call_operand.hbm [shape: bf16[16,32], index: 1, kind: input, shape index: {}]
  %s2 = inlined_call_operand.hbm [shape: f32[1,32], index: 2, kind: input, shape index: {}]
  %s3 = inlined_call_operand.vmem [shape: bf16[32,32], index: 3, kind: input, shape index: {}]
  %s4 = inlined_call_operand.hbm [shape: f32[1,32], index: 4, kind: input, shape index: {}]
  %s5 = inlined_call_operand.vmem [shape: bf16[32,32], index: 5, kind: input, shape index: {}]
  %s6 = inlined_call_operand.vmem [shape: f32[1,32], index: 6, kind: input, shape index: {}]
  %s7 = inlined_call_operand.vmem [shape: bf16[32,32], index: 7, kind: input, shape index: {}]
  %s8 = inlined_call_operand.vmem [shape: f32[1,32], index: 8, kind: input, shape index: {}]
  %s9 = inlined_call_operand.vmem [shape: f32[16,128], index: 9, kind: output, shape index: {}]
  %s10 = sld [smem:[#allocation0]]
  $region81: #{ffnet_forward.1} parent=0
    _
  %s12 = ssub.s32 1, %s10
  %s13 = scalar_select 0, %s12, %s10
  $region1: #{ffnet_forward.1} parent=0
    #allocation2 [shape = 'u8[4096]{0}', space=vmem, size = 0x1000, scoped, tag = 'input window, operand 1, single buffered']
    #allocation3 [shape = 's32[2]{0}', space=sflag, size = 0x8, scoped, tag = 'scoped memory for ffnet_forward.1']
    #allocation4 [shape = 'u8[512]{0}', space=vmem, size = 0x400, scoped, tag = 'input window, operand 2, single buffered']
    #allocation5 [shape = 's32[1]{0}', space=sflag, size = 0x4, scoped, tag = 'scoped memory for ffnet_forward.1']
    #allocation6 [shape = 'u8[512]{0}', space=vmem, size = 0x400, scoped, tag = 'input window, operand 4, single buffered']
    %14 = vsyncpa [#allocation3], 0
    %15 = vsyncpa [#allocation5], 0
    loop: start=0, step=1, limit=4
    $region2: #{ffnet_forward.1} parent=1 // loop_pre_header
      _
    $region3: #{ffnet_forward.1} parent=1 // loop_header
      %s17 = sphi 0, %s21
      %p18 = scmp.ge.s32.totalorder %s17, 4
      %s27 = sphi 0, %s29
      %s30 = sphi 0, %s27
      %s31 = sphi 0, %s30
      %s47 = sphi 0, %s31
      %s51 = sphi 0, %s51
      %s53 = sphi 0, %s51
      %s54 = sphi 0, %s53
      %s68 = sphi 0, %s54
      %s72 = sphi 0, %s72
      %s74 = sphi 0, %s72
      %s75 = sphi 0, %s74
      %s89 = sphi 0, %s75
      %s93 = sphi 0, %s93
      %s95 = sphi 0, %s93
      %s96 = sphi 0, %s95
      %s110 = sphi 0, %s96
      %s114 = sphi 0, %s114
      %s116 = sphi 0, %s114
      %s117 = sphi 0, %s116
      %s131 = sphi 0, %s117
      %s135 = sphi 0, %s135
      %s137 = sphi 0, %s135
      %s138 = sphi 0, %s137
      %s152 = sphi 0, %s138
      %s156 = sphi 0, %s156
      %s158 = sphi 0, %s156
      %s159 = sphi 0, %s158
      %s173 = sphi 0, %s159
      %s177 = sphi 0, %s177
      %s179 = sphi 0, %s177
      %s180 = sphi 0, %s179
      %s194 = sphi 0, %s180
      %s198 = sphi 0, %s198
      %s200 = sphi 0, %s198
      %s201 = sphi 0, %s200
      %s215 = sphi 0, %s201
      %s221 = sphi 0, %s223
      %s224 = sphi 0, %s221
      %s225 = sphi 0, %s224
      %s241 = sphi 0, %s225
    $region4: #{ffnet_forward.1} parent=1 // loop_header_branch
      %20 = sbr.rel (%p18) target = $region8
    $region5: #{ffnet_forward.1} parent=1 // loop_body
      %s22 = ssub.s32 %s17, 1
      %s23 = ssub.s32 %s17, 2
      %s24 = sadd.s32 %s17, 1
      %s25 = ssub.s32 %s17, %s24
      %p26 = scmp.eq.s32.totalorder %s25, 0
      %s28 = sadd.s32 %s27, 1
      %s29 = scalar_select %p26, %s27, %s28
      %p32 = pneg %p26
      %p33 = scmp.eq.s32.totalorder %s17, 1
      %p34 = por %p32, %p33
      %p35 = scmp.ne.s32.totalorder %s27, %s30
      %p36 = scmp.eq.s32.totalorder %s17, 0
      %p37 = por %p35, %p36
      %p38 = scmp.ne.s32.totalorder %s27, %s30
      %p39 = scmp.eq.s32.totalorder %s22, 1
      %p40 = por %p38, %p39
      %p41 = scmp.ne.s32.totalorder %s30, %s31
      %p42 = scmp.eq.s32.totalorder %s22, 0
      %p43 = por %p41, %p42
      %p44 = scmp.ne.s32.totalorder %s30, %s31
      %p45 = scmp.eq.s32.totalorder %s23, 1
      %p46 = por %p44, %p45
      %p48 = scmp.ne.s32.totalorder %s31, %s47
      %p49 = scmp.eq.s32.totalorder %s23, 0
      %p50 = por %p48, %p49
      %s52 = sadd.s32 %s51, 1
      %p55 = scmp.eq.s32.totalorder %s17, 1
      %p56 = scmp.ne.s32.totalorder %s51, %s53
      %p57 = scmp.eq.s32.totalorder %s17, 0
      %p58 = por %p56, %p57
      %p59 = scmp.ne.s32.totalorder %s51, %s53
      %p60 = scmp.eq.s32.totalorder %s22, 1
      %p61 = por %p59, %p60
      %p62 = scmp.ne.s32.totalorder %s53, %s54
      %p63 = scmp.eq.s32.totalorder %s22, 0
      %p64 = por %p62, %p63
      %p65 = scmp.ne.s32.totalorder %s53, %s54
      %p66 = scmp.eq.s32.totalorder %s23, 1
      %p67 = por %p65, %p66
      %p69 = scmp.ne.s32.totalorder %s54, %s68
      %p70 = scmp.eq.s32.totalorder %s23, 0
      %p71 = por %p69, %p70
      %s73 = sadd.s32 %s72, 1
      %p76 = scmp.eq.s32.totalorder %s17, 1
      %p77 = scmp.ne.s32.totalorder %s72, %s74
      %p78 = scmp.eq.s32.totalorder %s17, 0
      %p79 = por %p77, %p78
      %p80 = scmp.ne.s32.totalorder %s72, %s74
      %p81 = scmp.eq.s32.totalorder %s22, 1
      %p82 = por %p80, %p81
      %p83 = scmp.ne.s32.totalorder %s74, %s75
      %p84 = scmp.eq.s32.totalorder %s22, 0
      %p85 = por %p83, %p84
      %p86 = scmp.ne.s32.totalorder %s74, %s75
      %p87 = scmp.eq.s32.totalorder %s23, 1
      %p88 = por %p86, %p87
      %p90 = scmp.ne.s32.totalorder %s75, %s89
      %p91 = scmp.eq.s32.totalorder %s23, 0
      %p92 = por %p90, %p91
      %s94 = sadd.s32 %s93, 1
      %p97 = scmp.eq.s32.totalorder %s17, 1
      %p98 = scmp.ne.s32.totalorder %s93, %s95
      %p99 = scmp.eq.s32.totalorder %s17, 0
      %p100 = por %p98, %p99
      %p101 = scmp.ne.s32.totalorder %s93, %s95
      %p102 = scmp.eq.s32.totalorder %s22, 1
      %p103 = por %p101, %p102
      %p104 = scmp.ne.s32.totalorder %s95, %s96
      %p105 = scmp.eq.s32.totalorder %s22, 0
      %p106 = por %p104, %p105
      %p107 = scmp.ne.s32.totalorder %s95, %s96
      %p108 = scmp.eq.s32.totalorder %s23, 1
      %p109 = por %p107, %p108
      %p111 = scmp.ne.s32.totalorder %s96, %s110
      %p112 = scmp.eq.s32.totalorder %s23, 0
      %p113 = por %p111, %p112
      %s115 = sadd.s32 %s114, 1
      %p118 = scmp.eq.s32.totalorder %s17, 1
      %p119 = scmp.ne.s32.totalorder %s114, %s116
      %p120 = scmp.eq.s32.totalorder %s17, 0
      %p121 = por %p119, %p120
      %p122 = scmp.ne.s32.totalorder %s114, %s116
      %p123 = scmp.eq.s32.totalorder %s22, 1
      %p124 = por %p122, %p123
      %p125 = scmp.ne.s32.totalorder %s116, %s117
      %p126 = scmp.eq.s32.totalorder %s22, 0
      %p127 = por %p125, %p126
      %p128 = scmp.ne.s32.totalorder %s116, %s117
      %p129 = scmp.eq.s32.totalorder %s23, 1
      %p130 = por %p128, %p129
      %p132 = scmp.ne.s32.totalorder %s117, %s131
      %p133 = scmp.eq.s32.totalorder %s23, 0
      %p134 = por %p132, %p133
      %s136 = sadd.s32 %s135, 1
      %p139 = scmp.eq.s32.totalorder %s17, 1
      %p140 = scmp.ne.s32.totalorder %s135, %s137
      %p141 = scmp.eq.s32.totalorder %s17, 0
      %p142 = por %p140, %p141
      %p143 = scmp.ne.s32.totalorder %s135, %s137
      %p144 = scmp.eq.s32.totalorder %s22, 1
      %p145 = por %p143, %p144
      %p146 = scmp.ne.s32.totalorder %s137, %s138
      %p147 = scmp.eq.s32.totalorder %s22, 0
      %p148 = por %p146, %p147
      %p149 = scmp.ne.s32.totalorder %s137, %s138
      %p150 = scmp.eq.s32.totalorder %s23, 1
      %p151 = por %p149, %p150
      %p153 = scmp.ne.s32.totalorder %s138, %s152
      %p154 = scmp.eq.s32.totalorder %s23, 0
      %p155 = por %p153, %p154
      %s157 = sadd.s32 %s156, 1
      %p160 = scmp.eq.s32.totalorder %s17, 1
      %p161 = scmp.ne.s32.totalorder %s156, %s158
      %p162 = scmp.eq.s32.totalorder %s17, 0
      %p163 = por %p161, %p162
      %p164 = scmp.ne.s32.totalorder %s156, %s158
      %p165 = scmp.eq.s32.totalorder %s22, 1
      %p166 = por %p164, %p165
      %p167 = scmp.ne.s32.totalorder %s158, %s159
      %p168 = scmp.eq.s32.totalorder %s22, 0
      %p169 = por %p167, %p168
      %p170 = scmp.ne.s32.totalorder %s158, %s159
      %p171 = scmp.eq.s32.totalorder %s23, 1
      %p172 = por %p170, %p171
      %p174 = scmp.ne.s32.totalorder %s159, %s173
      %p175 = scmp.eq.s32.totalorder %s23, 0
      %p176 = por %p174, %p175
      %s178 = sadd.s32 %s177, 1
      %p181 = scmp.eq.s32.totalorder %s17, 1
      %p182 = scmp.ne.s32.totalorder %s177, %s179
      %p183 = scmp.eq.s32.totalorder %s17, 0
      %p184 = por %p182, %p183
      %p185 = scmp.ne.s32.totalorder %s177, %s179
      %p186 = scmp.eq.s32.totalorder %s22, 1
      %p187 = por %p185, %p186
      %p188 = scmp.ne.s32.totalorder %s179, %s180
      %p189 = scmp.eq.s32.totalorder %s22, 0
      %p190 = por %p188, %p189
      %p191 = scmp.ne.s32.totalorder %s179, %s180
      %p192 = scmp.eq.s32.totalorder %s23, 1
      %p193 = por %p191, %p192
      %p195 = scmp.ne.s32.totalorder %s180, %s194
      %p196 = scmp.eq.s32.totalorder %s23, 0
      %p197 = por %p195, %p196
      %s199 = sadd.s32 %s198, 1
      %p202 = scmp.eq.s32.totalorder %s17, 1
      %p203 = scmp.ne.s32.totalorder %s198, %s200
      %p204 = scmp.eq.s32.totalorder %s17, 0
      %p205 = por %p203, %p204
      %p206 = scmp.ne.s32.totalorder %s198, %s200
      %p207 = scmp.eq.s32.totalorder %s22, 1
      %p208 = por %p206, %p207
      %p209 = scmp.ne.s32.totalorder %s200, %s201
      %p210 = scmp.eq.s32.totalorder %s22, 0
      %p211 = por %p209, %p210
      %p212 = scmp.ne.s32.totalorder %s200, %s201
      %p213 = scmp.eq.s32.totalorder %s23, 1
      %p214 = por %p212, %p213
      %p216 = scmp.ne.s32.totalorder %s201, %s215
      %p217 = scmp.eq.s32.totalorder %s23, 0
      %p218 = por %p216, %p217
      %s219 = ssub.s32 %s17, %s24
      %p220 = scmp.eq.s32.totalorder %s219, 0
      %s222 = sadd.s32 %s221, 1
      %s223 = scalar_select %p220, %s221, %s222
      %p226 = pneg %p220
      %p227 = scmp.eq.s32.totalorder %s17, 1
      %p228 = por %p226, %p227
      %p229 = scmp.ne.s32.totalorder %s221, %s224
      %p230 = scmp.eq.s32.totalorder %s17, 0
      %p231 = por %p229, %p230
      %p232 = scmp.ne.s32.totalorder %s221, %s224
      %p233 = scmp.eq.s32.totalorder %s22, 1
      %p234 = por %p232, %p233
      %p235 = scmp.ne.s32.totalorder %s224, %s225
      %p236 = scmp.eq.s32.totalorder %s22, 0
      %p237 = por %p235, %p236
      %p238 = scmp.ne.s32.totalorder %s224, %s225
      %p239 = scmp.eq.s32.totalorder %s23, 1
      %p240 = por %p238, %p239
      %p242 = scmp.ne.s32.totalorder %s225, %s241
      %p243 = scmp.eq.s32.totalorder %s23, 0
      %p244 = por %p242, %p243
      %p245 = scmp.le.s32.totalorder 1, %s17
      %p246 = scmp.lt.s32.totalorder %s17, 3
      %p247 = pnand %p245, %p246
      %p248 = pneg %p247
      // Predicated region
      $region9: #{ffnet_forward.1} parent=5 // pred_check
        _
      $region10: #{ffnet_forward.1} parent=5 // pred_check_branch
        %250 = sbr.rel (%p247) target = $region12
      $region11: #{ffnet_forward.1} parent=5 // pred_region
        %s251 = ssub.s32 %s17, 1
        // Predicated region
        $region13: #{ffnet_forward.1} parent=11 // pred_check
          %p252 = pneg %p64
        $region14: #{ffnet_forward.1} parent=11 // pred_check_branch
          %254 = sbr.rel (%p252) target = $region16
        $region15: #{ffnet_forward.1} parent=11 // pred_region
          %s256 = ssub.s32 128, 128
          %257 = vsyncadd [#allocation3], %s256
          %s258 = sshll.u32 [#allocation2], 4
          %s259 = int_to_ptr.vmem [resolvable:$true] %s258
          %264 = dma.hbm_to_vmem [thread:$0]  %s1, 128, %s259, [#allocation3], 64, 64, 4
        $region16: #{ffnet_forward.1} parent=11 // pred_fallthru
          _
        // Predicated region
        $region17: #{ffnet_forward.1} parent=11 // pred_check
          %p265 = pneg %p85
        $region18: #{ffnet_forward.1} parent=11 // pred_check_branch
          %267 = sbr.rel (%p265) target = $region20
        $region19: #{ffnet_forward.1} parent=11 // pred_region
          %s269 = ssub.s32 16, 16
          %270 = vsyncadd [#allocation5], %s269
          %s272 = sshll.u32 [#allocation4], 4
          %s273 = int_to_ptr.vmem [resolvable:$true] %s272
          %275 = dma.hbm_to_vmem [thread:$0]  %s2, 16, %s273, [#allocation5]
        $region20: #{ffnet_forward.1} parent=11 // pred_fallthru
          _
        // Predicated region
        $region21: #{ffnet_forward.1} parent=11 // pred_check
          %p276 = pneg %p106
        $region22: #{ffnet_forward.1} parent=11 // pred_check_branch
          %278 = sbr.rel (%p276) target = $region24
        $region23: #{ffnet_forward.1} parent=11 // pred_region
          _
        $region24: #{ffnet_forward.1} parent=11 // pred_fallthru
          _
        // Predicated region
        $region25: #{ffnet_forward.1} parent=11 // pred_check
          %p279 = pneg %p127
        $region26: #{ffnet_forward.1} parent=11 // pred_check_branch
          %281 = sbr.rel (%p279) target = $region28
        $region27: #{ffnet_forward.1} parent=11 // pred_region
          %s283 = ssub.s32 16, 16
          %284 = vsyncadd [#allocation5], %s283
          %s286 = sshll.u32 [#allocation6], 4
          %s287 = int_to_ptr.vmem [resolvable:$true] %s286
          %289 = dma.hbm_to_vmem [thread:$0]  %s4, 16, %s287, [#allocation5]
        $region28: #{ffnet_forward.1} parent=11 // pred_fallthru
          _
        // Predicated region
        $region29: #{ffnet_forward.1} parent=11 // pred_check
          %p290 = pneg %p148
        $region30: #{ffnet_forward.1} parent=11 // pred_check_branch
          %292 = sbr.rel (%p290) target = $region32
        $region31: #{ffnet_forward.1} parent=11 // pred_region
          _
        $region32: #{ffnet_forward.1} parent=11 // pred_fallthru
          _
        // Predicated region
        $region33: #{ffnet_forward.1} parent=11 // pred_check
          %p293 = pneg %p169
        $region34: #{ffnet_forward.1} parent=11 // pred_check_branch
          %295 = sbr.rel (%p293) target = $region36
        $region35: #{ffnet_forward.1} parent=11 // pred_region
          _
        $region36: #{ffnet_forward.1} parent=11 // pred_fallthru
          _
        // Predicated region
        $region37: #{ffnet_forward.1} parent=11 // pred_check
          %p296 = pneg %p190
        $region38: #{ffnet_forward.1} parent=11 // pred_check_branch
          %298 = sbr.rel (%p296) target = $region40
        $region39: #{ffnet_forward.1} parent=11 // pred_region
          _
        $region40: #{ffnet_forward.1} parent=11 // pred_fallthru
          _
        // Predicated region
        $region41: #{ffnet_forward.1} parent=11 // pred_check
          %p299 = pneg %p211
        $region42: #{ffnet_forward.1} parent=11 // pred_check_branch
          %301 = sbr.rel (%p299) target = $region44
        $region43: #{ffnet_forward.1} parent=11 // pred_region
          _
        $region44: #{ffnet_forward.1} parent=11 // pred_fallthru
          _
      $region12: #{ffnet_forward.1} parent=5 // pred_fallthru
        _
      %p302 = scmp.lt.s32.totalorder %s17, 2
      // Predicated region
      $region45: #{ffnet_forward.1} parent=5 // pred_check
        %p303 = pneg %p302
      $region46: #{ffnet_forward.1} parent=5 // pred_check_branch
        %305 = sbr.rel (%p303) target = $region48
      $region47: #{ffnet_forward.1} parent=5 // pred_region
        // Predicated region
        $region49: #{ffnet_forward.1} parent=47 // pred_check
          %p306 = pneg %p37
        $region50: #{ffnet_forward.1} parent=47 // pred_check_branch
          %308 = sbr.rel (%p306) target = $region52
        $region51: #{ffnet_forward.1} parent=47 // pred_region
          %p309 = scmp.lt.s32.totalorder %s17, 1
          %s310 = scalar_select %p309, %s17, 1
          %s311 = smul.addr %s310, 8
          %s312 = scalar_lea.vmem %s0, %s311
        $region52: #{ffnet_forward.1} parent=47 // pred_fallthru
          _
      $region48: #{ffnet_forward.1} parent=5 // pred_fallthru
        _
      %p313 = scmp.le.s32.totalorder 1, %s17
      %p314 = scmp.lt.s32.totalorder %s17, 3
      %p315 = pnand %p313, %p314
      %p316 = pneg %p315
      // Predicated region
      $region53: #{ffnet_forward.1} parent=5 // pred_check
        _
      $region54: #{ffnet_forward.1} parent=5 // pred_check_branch
        %318 = sbr.rel (%p315) target = $region56
      $region55: #{ffnet_forward.1} parent=5 // pred_region
        %s319 = ssub.s32 %s17, 1
        // Predicated region
        $region57: #{ffnet_forward.1} parent=55 // pred_check
          %p320 = pneg %p64
        $region58: #{ffnet_forward.1} parent=55 // pred_check_branch
          %322 = sbr.rel (%p320) target = $region60
        $region59: #{ffnet_forward.1} parent=55 // pred_region
          %323 = dma.done [#allocation3], 128
        $region60: #{ffnet_forward.1} parent=55 // pred_fallthru
          _
        // Predicated region
        $region61: #{ffnet_forward.1} parent=55 // pred_check
          %p324 = pneg %p85
        $region62: #{ffnet_forward.1} parent=55 // pred_check_branch
          %326 = sbr.rel (%p324) target = $region64
        $region63: #{ffnet_forward.1} parent=55 // pred_region
          %327 = dma.done [#allocation5], 16
        $region64: #{ffnet_forward.1} parent=55 // pred_fallthru
          _
        // Predicated region
        $region65: #{ffnet_forward.1} parent=55 // pred_check
          %p328 = pneg %p127
        $region66: #{ffnet_forward.1} parent=55 // pred_check_branch
          %330 = sbr.rel (%p328) target = $region68
        $region67: #{ffnet_forward.1} parent=55 // pred_region
          %331 = dma.done [#allocation5], 16
        $region68: #{ffnet_forward.1} parent=55 // pred_fallthru
          _
        %p332 = scmp.lt.s32.totalorder %s22, 1
        %s333 = scalar_select %p332, %s22, 1
        %s334 = smul.addr %s333, 8
        %s335 = scalar_lea.vmem %s0, %s334
        %p336 = pneg %p43
        %p337 = pneg %p40
        %p338 = pneg %p64
        %p339 = pneg %p61
        %p340 = pneg %p85
        %p341 = pneg %p82
        %p342 = pneg %p106
        %p343 = pneg %p103
        %p344 = pneg %p127
        %p345 = pneg %p124
        %p346 = pneg %p148
        %p347 = pneg %p145
        %p348 = pneg %p169
        %p349 = pneg %p166
        %p350 = pneg %p190
        %p351 = pneg %p187
        %p352 = pneg %p211
        %p353 = pneg %p208
        %p354 = pneg %p237
        %p355 = pneg %p234
        %p356 = scmp.lt.s32.totalorder %s22, 1
        %s357 = scalar_select %p356, %s22, 1
        %s358 = smul.addr %s357, 8
        %s359 = scalar_lea.vmem %s9, %s358
        %p360 = scmp.lt.s32.totalorder %s22, 1
        %s361 = scalar_select %p360, %s22, 1
        %s362 = smul.addr %s361, 8
        %s363 = scalar_lea.vmem %s0, %s362
        %p364 = scmp.lt.s32.totalorder %s22, 1
        %s365 = scalar_select %p364, %s22, 1
        %s366 = smul.addr %s365, 8
        %s367 = scalar_lea.vmem %s9, %s366
        %v369 = vld [vmem:[%s363] sm:$0xff]
        %vm370 = vcmask 130048
        %v371 = vsel %vm370, %v369, 0.0
        %372 = vadd.xlane.f32.xlu0 %v371
        %v373 = vpop.xlane.xlu0 %372
        %v374 = vrcp.pop 16.0
        %v375 = vmul.f32 %v373, %v374
        %v376 = vsub.f32 %v369, %v375
        %v377 = vmul.f32 %v376, %v376
        %v378 = vsel %vm370, %v377, 0.0
        %379 = vadd.xlane.f32.xlu0 %v378
        %v380 = vpop.xlane.xlu0 %379
        %v381 = vmul.f32 %v380, %v374
        %v382 = vadd.f32 %v381, 1e-05
        %v383 = vrsqrt.pop %v382
        %v384 = vmul.f32 %v376, %v383
        %v385 = vpack.c.bf16 %v384, %v384
        %v386 = vld [vmem:[#allocation2] sm:$0xf]
        %v387 = vld [vmem:[#allocation2 + $0x4] sm:$0xf]
        %v388 = vld [vmem:[#allocation4] sm:$0x1]
        %v390 = vlaneseq
        %v391 = vshrl.u32 %v390, 7
        %v392 = vsub.s32 0, %v391
        %v393 = vrot.slane %v388, %v392
        %v397 = vunpack.c.l.b16 %v386
        %v398 = vunpack.c.l.b16 %v387
        %v399 = vpack.c.b16 %v398, %v397
        %v402 = vsel %vm370, %v385, 0
        %404 = vmatprep.subr.bf16.mxu0 0
        %405 = vmatpush1.bf16.msra.mxu0 %v399
        %406 = vmatprep.subr.bf16.mxu0 0
        %407 = vmatpush1.bf16.msra.mxu0 0
        %408 = vmatprep.subr.bf16.mxu0 0
        %409 = vmatpush1.bf16.msra.mxu0 0
        %410 = vmatprep.subr.bf16.mxu0 0
        %411 = vmatpush1.bf16.msra.mxu0 0
        %412 = vmatprep.subr.bf16.mxu0 0
        %413 = vmatpush1.bf16.msra.mxu0 0
        %414 = vmatprep.subr.bf16.mxu0 0
        %415 = vmatpush1.bf16.msra.mxu0 0
        %416 = vmatprep.subr.bf16.mxu0 0
        %417 = vmatpush1.bf16.msra.mxu0 0
        %418 = vmatprep.subr.bf16.mxu0 0
        %419 = vmatpush1.bf16.msra.mxu0 0
        %420 = vmatprep.subr.bf16.mxu0 0
        %421 = vmatpush1.bf16.msra.mxu0 0
        %422 = vmatprep.subr.bf16.mxu0 0
        %423 = vmatpush1.bf16.msra.mxu0 0
        %424 = vmatprep.subr.bf16.mxu0 0
        %425 = vmatpush1.bf16.msra.mxu0 0
        %426 = vmatprep.subr.bf16.mxu0 0
        %427 = vmatpush1.bf16.msra.mxu0 0
        %428 = vmatprep.subr.bf16.mxu0 0
        %429 = vmatpush1.bf16.msra.mxu0 0
        %430 = vmatprep.subr.bf16.mxu0 0
        %431 = vmatpush1.bf16.msra.mxu0 0
        %432 = vmatprep.subr.bf16.mxu0 0
        %433 = vmatpush1.bf16.msra.mxu0 0
        %434 = vmatprep.subr.bf16.mxu0 0
        %435 = vmatpush1.bf16.msra.mxu0 0
        %436 = vmatprep.mubr.bf16.mxu0 0
        %437 = vmatmul.mubr.bf16.gmra.mrb[0].mxu0 %v402
        %v438 = vpop.f32.mrb[0].mxu0
        %v439 = vadd.f32 %v393, %v438
        %v440 = vpop.f32.mrb[0].mxu0
        %v441 = vpop.f32.mrb[0].mxu0
        %v442 = vpop.f32.mrb[0].mxu0
        %443 = vdwg.mxu0
        %v444 = vmax.f32 %v439, 0.0
        %vm445 = vcmask 261120
        %v446 = vsel %vm445, %v444, 0.0
        %447 = vadd.xlane.f32.xlu0 %v446
        %v448 = vpop.xlane.xlu0 %447
        %v449 = vrcp.pop 32.0
        %v450 = vmul.f32 %v448, %v449
        %v451 = vsub.f32 %v444, %v450
        %v452 = vmul.f32 %v451, %v451
        %v453 = vsel %vm445, %v452, 0.0
        %454 = vadd.xlane.f32.xlu0 %v453
        %v455 = vpop.xlane.xlu0 %454
        %v456 = vmul.f32 %v455, %v449
        %v457 = vadd.f32 %v456, 1e-05
        %v458 = vrsqrt.pop %v457
        %v459 = vmul.f32 %v451, %v458
        %v460 = vpack.c.bf16 %v459, %v459
        %v461 = vld [vmem:[%s3] sm:$0xf]
        %v462 = vld [vmem:[%s3 + $0x4] sm:$0xf]
        %v463 = vld [vmem:[%s3 + $0x8] sm:$0xf]
        %v464 = vld [vmem:[%s3 + $0xc] sm:$0xf]
        %v465 = vld [vmem:[#allocation6] sm:$0x1]
        %v467 = vlaneseq
        %v468 = vshrl.u32 %v467, 7
        %v469 = vsub.s32 0, %v468
        %v470 = vrot.slane %v465, %v469
        %v476 = vunpack.c.l.b16 %v461
        %v477 = vunpack.c.l.b16 %v462
        %v478 = vunpack.c.l.b16 %v463
        %v479 = vunpack.c.l.b16 %v464
        %v480 = vpack.c.b16 %v477, %v476
        %v481 = vpack.c.b16 %v479, %v478
        %v485 = vsel %vm445, %v460, 0
        %487 = vmatprep.subr.bf16.mxu0 0
        %488 = vmatpush1.bf16.msra.mxu0 %v480
        %489 = vmatprep.subr.bf16.mxu0 0
        %490 = vmatpush1.bf16.msra.mxu0 %v481
        %491 = vmatprep.subr.bf16.mxu0 0
        %492 = vmatpush1.bf16.msra.mxu0 0
        %493 = vmatprep.subr.bf16.mxu0 0
        %494 = vmatpush1.bf16.msra.mxu0 0
        %495 = vmatprep.subr.bf16.mxu0 0
        %496 = vmatpush1.bf16.msra.mxu0 0
        %497 = vmatprep.subr.bf16.mxu0 0
        %498 = vmatpush1.bf16.msra.mxu0 0
        %499 = vmatprep.subr.bf16.mxu0 0
        %500 = vmatpush1.bf16.msra.mxu0 0
        %501 = vmatprep.subr.bf16.mxu0 0
        %502 = vmatpush1.bf16.msra.mxu0 0
        %503 = vmatprep.subr.bf16.mxu0 0
        %504 = vmatpush1.bf16.msra.mxu0 0
        %505 = vmatprep.subr.bf16.mxu0 0
        %506 = vmatpush1.bf16.msra.mxu0 0
        %507 = vmatprep.subr.bf16.mxu0 0
        %508 = vmatpush1.bf16.msra.mxu0 0
        %509 = vmatprep.subr.bf16.mxu0 0
        %510 = vmatpush1.bf16.msra.mxu0 0
        %511 = vmatprep.subr.bf16.mxu0 0
        %512 = vmatpush1.bf16.msra.mxu0 0
        %513 = vmatprep.subr.bf16.mxu0 0
        %514 = vmatpush1.bf16.msra.mxu0 0
        %515 = vmatprep.subr.bf16.mxu0 0
        %516 = vmatpush1.bf16.msra.mxu0 0
        %517 = vmatprep.subr.bf16.mxu0 0
        %518 = vmatpush1.bf16.msra.mxu0 0
        %519 = vmatprep.mubr.bf16.mxu0 0
        %520 = vmatmul.mubr.bf16.gmra.mrb[0].mxu0 %v485
        %v521 = vpop.f32.mrb[0].mxu0
        %v522 = vadd.f32 %v470, %v521
        %v523 = vpop.f32.mrb[0].mxu0
        %v524 = vpop.f32.mrb[0].mxu0
        %v525 = vpop.f32.mrb[0].mxu0
        %526 = vdwg.mxu0
        %v527 = vmax.f32 %v522, 0.0
        %v528 = vsel %vm445, %v527, 0.0
        %529 = vadd.xlane.f32.xlu0 %v528
        %v530 = vpop.xlane.xlu0 %529
        %v531 = vmul.f32 %v530, %v449
        %v532 = vsub.f32 %v527, %v531
        %v533 = vmul.f32 %v532, %v532
        %v534 = vsel %vm445, %v533, 0.0
        %535 = vadd.xlane.f32.xlu0 %v534
        %v536 = vpop.xlane.xlu0 %535
        %v537 = vmul.f32 %v536, %v449
        %v538 = vadd.f32 %v537, 1e-05
        %v539 = vrsqrt.pop %v538
        %v540 = vmul.f32 %v532, %v539
        %v541 = vpack.c.bf16 %v540, %v540
        %v542 = vld [vmem:[%s5] sm:$0xf]
        %v543 = vld [vmem:[%s5 + $0x4] sm:$0xf]
        %v544 = vld [vmem:[%s5 + $0x8] sm:$0xf]
        %v545 = vld [vmem:[%s5 + $0xc] sm:$0xf]
        %v546 = vld [vmem:[%s6] sm:$0x1]
        %v548 = vlaneseq
        %v549 = vshrl.u32 %v548, 7
        %v550 = vsub.s32 0, %v549
        %v551 = vrot.slane %v546, %v550
        %v557 = vunpack.c.l.b16 %v542
        %v558 = vunpack.c.l.b16 %v543
        %v559 = vunpack.c.l.b16 %v544
        %v560 = vunpack.c.l.b16 %v545
        %v561 = vpack.c.b16 %v558, %v557
        %v562 = vpack.c.b16 %v560, %v559
        %v566 = vsel %vm445, %v541, 0
        %568 = vmatprep.subr.bf16.mxu0 0
        %569 = vmatpush1.bf16.msra.mxu0 %v561
        %570 = vmatprep.subr.bf16.mxu0 0
        %571 = vmatpush1.bf16.msra.mxu0 %v562
        %572 = vmatprep.subr.bf16.mxu0 0
        %573 = vmatpush1.bf16.msra.mxu0 0
        %574 = vmatprep.subr.bf16.mxu0 0
        %575 = vmatpush1.bf16.msra.mxu0 0
        %576 = vmatprep.subr.bf16.mxu0 0
        %577 = vmatpush1.bf16.msra.mxu0 0
        %578 = vmatprep.subr.bf16.mxu0 0
        %579 = vmatpush1.bf16.msra.mxu0 0
        %580 = vmatprep.subr.bf16.mxu0 0
        %581 = vmatpush1.bf16.msra.mxu0 0
        %582 = vmatprep.subr.bf16.mxu0 0
        %583 = vmatpush1.bf16.msra.mxu0 0
        %584 = vmatprep.subr.bf16.mxu0 0
        %585 = vmatpush1.bf16.msra.mxu0 0
        %586 = vmatprep.subr.bf16.mxu0 0
        %587 = vmatpush1.bf16.msra.mxu0 0
        %588 = vmatprep.subr.bf16.mxu0 0
        %589 = vmatpush1.bf16.msra.mxu0 0
        %590 = vmatprep.subr.bf16.mxu0 0
        %591 = vmatpush1.bf16.msra.mxu0 0
        %592 = vmatprep.subr.bf16.mxu0 0
        %593 = vmatpush1.bf16.msra.mxu0 0
        %594 = vmatprep.subr.bf16.mxu0 0
        %595 = vmatpush1.bf16.msra.mxu0 0
        %596 = vmatprep.subr.bf16.mxu0 0
        %597 = vmatpush1.bf16.msra.mxu0 0
        %598 = vmatprep.subr.bf16.mxu0 0
        %599 = vmatpush1.bf16.msra.mxu0 0
        %600 = vmatprep.mubr.bf16.mxu0 0
        %601 = vmatmul.mubr.bf16.gmra.mrb[0].mxu0 %v566
        %v602 = vpop.f32.mrb[0].mxu0
        %v603 = vadd.f32 %v551, %v602
        %v604 = vpop.f32.mrb[0].mxu0
        %v605 = vpop.f32.mrb[0].mxu0
        %v606 = vpop.f32.mrb[0].mxu0
        %607 = vdwg.mxu0
        %v608 = vmax.f32 %v603, 0.0
        %v609 = vsel %vm445, %v608, 0.0
        %610 = vadd.xlane.f32.xlu0 %v609
        %v611 = vpop.xlane.xlu0 %610
        %v612 = vmul.f32 %v611, %v449
        %v613 = vsub.f32 %v608, %v612
        %v614 = vmul.f32 %v613, %v613
        %v615 = vsel %vm445, %v614, 0.0
        %616 = vadd.xlane.f32.xlu0 %v615
        %v617 = vpop.xlane.xlu0 %616
        %v618 = vmul.f32 %v617, %v449
        %v619 = vadd.f32 %v618, 1e-05
        %v620 = vrsqrt.pop %v619
        %v621 = vmul.f32 %v613, %v620
        %v622 = vpack.c.bf16 %v621, %v621
        %v623 = vld [vmem:[%s7] sm:$0xf]
        %v624 = vld [vmem:[%s7 + $0x4] sm:$0xf]
        %v625 = vld [vmem:[%s7 + $0x8] sm:$0xf]
        %v626 = vld [vmem:[%s7 + $0xc] sm:$0xf]
        %v627 = vld [vmem:[%s8] sm:$0x1]
        %v629 = vlaneseq
        %v630 = vshrl.u32 %v629, 7
        %v631 = vsub.s32 0, %v630
        %v632 = vrot.slane %v627, %v631
        %v638 = vunpack.c.l.b16 %v623
        %v639 = vunpack.c.l.b16 %v624
        %v640 = vunpack.c.l.b16 %v625
        %v641 = vunpack.c.l.b16 %v626
        %v642 = vpack.c.b16 %v639, %v638
        %v643 = vpack.c.b16 %v641, %v640
        %v647 = vsel %vm445, %v622, 0
        %649 = vmatprep.subr.bf16.mxu0 0
        %650 = vmatpush1.bf16.msra.mxu0 %v642
        %651 = vmatprep.subr.bf16.mxu0 0
        %652 = vmatpush1.bf16.msra.mxu0 %v643
        %653 = vmatprep.subr.bf16.mxu0 0
        %654 = vmatpush1.bf16.msra.mxu0 0
        %655 = vmatprep.subr.bf16.mxu0 0
        %656 = vmatpush1.bf16.msra.mxu0 0
        %657 = vmatprep.subr.bf16.mxu0 0
        %658 = vmatpush1.bf16.msra.mxu0 0
        %659 = vmatprep.subr.bf16.mxu0 0
        %660 = vmatpush1.bf16.msra.mxu0 0
        %661 = vmatprep.subr.bf16.mxu0 0
        %662 = vmatpush1.bf16.msra.mxu0 0
        %663 = vmatprep.subr.bf16.mxu0 0
        %664 = vmatpush1.bf16.msra.mxu0 0
        %665 = vmatprep.subr.bf16.mxu0 0
        %666 = vmatpush1.bf16.msra.mxu0 0
        %667 = vmatprep.subr.bf16.mxu0 0
        %668 = vmatpush1.bf16.msra.mxu0 0
        %669 = vmatprep.subr.bf16.mxu0 0
        %670 = vmatpush1.bf16.msra.mxu0 0
        %671 = vmatprep.subr.bf16.mxu0 0
        %672 = vmatpush1.bf16.msra.mxu0 0
        %673 = vmatprep.subr.bf16.mxu0 0
        %674 = vmatpush1.bf16.msra.mxu0 0
        %675 = vmatprep.subr.bf16.mxu0 0
        %676 = vmatpush1.bf16.msra.mxu0 0
        %677 = vmatprep.subr.bf16.mxu0 0
        %678 = vmatpush1.bf16.msra.mxu0 0
        %679 = vmatprep.subr.bf16.mxu0 0
        %680 = vmatpush1.bf16.msra.mxu0 0
        %681 = vmatprep.mubr.bf16.mxu0 0
        %682 = vmatmul.mubr.bf16.gmra.mrb[0].mxu0 %v647
        %v683 = vpop.f32.mrb[0].mxu0
        %v684 = vadd.f32 %v632, %v683
        %v685 = vpop.f32.mrb[0].mxu0
        %v686 = vpop.f32.mrb[0].mxu0
        %v687 = vpop.f32.mrb[0].mxu0
        %688 = vdwg.mxu0
        %v689 = vmax.f32 %v684, 0.0
        %691 = vrot.lane.b32.xlu0 %v527, 32
        %v692 = vpop.permute.xlu0 %691
        %695 = vrot.lane.b32.xlu0 %v608, 64
        %v696 = vpop.permute.xlu0 %695
        %699 = vrot.lane.b32.xlu0 %v689, 96
        %v700 = vpop.permute.xlu0 %699
        %v702 = vsel %vm445, %v444, %v692
        %vm703 = vcmask 523264
        %v704 = vsel %vm703, %v702, %v696
        %vm705 = vcmask 785408
        %v706 = vsel %vm705, %v704, %v700
        %707 = vst [vmem:[%s367] sm:$0xff] %v706
        %p708 = scmp.lt.s32.totalorder %s22, 1
        %s709 = scalar_select %p708, %s22, 1
        %s710 = smul.addr %s709, 8
        %s711 = scalar_lea.vmem %s9, %s710
        // Predicated region
        $region69: #{ffnet_forward.1} parent=55 // pred_check
          %p712 = pneg %p234
        $region70: #{ffnet_forward.1} parent=55 // pred_check_branch
          %714 = sbr.rel (%p712) target = $region72
        $region71: #{ffnet_forward.1} parent=55 // pred_region
          _
        $region72: #{ffnet_forward.1} parent=55 // pred_fallthru
          _
      $region56: #{ffnet_forward.1} parent=5 // pred_fallthru
        _
      %p715 = scmp.le.s32.totalorder 2, %s17
      // Predicated region
      $region73: #{ffnet_forward.1} parent=5 // pred_check
        %p716 = pneg %p715
      $region74: #{ffnet_forward.1} parent=5 // pred_check_branch
        %718 = sbr.rel (%p716) target = $region76
      $region75: #{ffnet_forward.1} parent=5 // pred_region
        %s719 = ssub.s32 %s17, 2
        // Predicated region
        $region77: #{ffnet_forward.1} parent=75 // pred_check
          %p720 = pneg %p240
        $region78: #{ffnet_forward.1} parent=75 // pred_check_branch
          %722 = sbr.rel (%p720) target = $region80
        $region79: #{ffnet_forward.1} parent=75 // pred_region
          %p723 = scmp.lt.s32.totalorder %s23, 1
          %s724 = scalar_select %p723, %s23, 1
          %s725 = smul.addr %s724, 8
          %s726 = scalar_lea.vmem %s9, %s725
        $region80: #{ffnet_forward.1} parent=75 // pred_fallthru
          _
      $region76: #{ffnet_forward.1} parent=5 // pred_fallthru
        _
    $region6: #{ffnet_forward.1} parent=1 // loop_footer
      %s21 = sadd.s32 1, %s17
    $region7: #{ffnet_forward.1} parent=1 // loop_footer_branch
      %16 = sbr.rel target = $region3
    $region8: #{ffnet_forward.1} parent=1 // loop_exit
      _
    %727 = vsyncpa [#allocation3], 1
    %s728 = scalar_lea.sflag [#allocation3], 1
    %729 = vsyncpa %s728, 1
    %730 = vsyncpa [#allocation5], 1

</llo_original>
